<compile_context>
chip_gen: v7x
topology: tpu7x:2x2x1
jax: 0.10.0
libtpu: 0.0.40
codegen_flags: <defaults>
</compile_context>

<pallas_src>
import functools

import jax
import jax.numpy as jnp
from jax.experimental import pallas as pl
from jax.experimental.pallas import tpu as pltpu

LN_EPS = 1e-5  # nn.LayerNorm default


def _round_up(x, m):
    return ((x + m - 1) // m) * m


def _pad2(a, rows, cols):
    return jnp.pad(a, ((0, rows - a.shape[0]), (0, cols - a.shape[1])))


def _actor_kernel(feature_dim,                   # python int (closed over)
                  obs_ref,                       # (TB, TK)  bf16
                  w0_ref,                        # (TK, Df)  bf16 (K-blocked)
                  b0_ref,                        # (1, Df)   f32
                  g_ref, beta_ref,               # LayerNorm affine (f32)
                  w1_ref, b1_ref,                # policy Linear 1
                  w2_ref, b2_ref,                # policy Linear 2 (pixels-only)
                  w3_ref, b3_ref,                # policy Linear 3 (output)
                  mu_ref,                        # (TB, Da)  out
                  acc_ref):                      # (TB, Df)  f32 scratch
    f32 = jnp.float32
    bf16 = jnp.bfloat16
    k = pl.program_id(1)

    # ---- trunk matmul, accumulated over the obs K-tiles ----
    @pl.when(k == 0)
    def _():
        acc_ref[...] = jnp.zeros_like(acc_ref)

    acc_ref[...] += jnp.dot(obs_ref[...], w0_ref[...], preferred_element_type=f32)

    # ---- epilogue: LayerNorm -> Tanh -> policy MLP, on the last K step ----
    @pl.when(k == pl.num_programs(1) - 1)
    def _():
        h = acc_ref[...] + b0_ref[...]

        # One-pass moments over the *true* feature_dim.  Padded columns of h
        # are exactly zero (zero-padded W0/b0), so they contribute nothing to
        # either sum; no lane mask needed.
        inv_f = 1.0 / feature_dim
        mean = jnp.sum(h, axis=-1, keepdims=True) * inv_f
        sumsq = jnp.sum(h * h, axis=-1, keepdims=True) * inv_f
        var = jnp.maximum(sumsq - mean * mean, 0.0)   # guard f32 cancellation
        hn = (h - mean) * jax.lax.rsqrt(var + LN_EPS)
        # gamma/beta are zero in the padded lanes -> padded lanes become
        # tanh(0) = 0 before feeding matmul1.
        hn = jnp.tanh(hn * g_ref[...] + beta_ref[...])

        # policy MLP: bf16 operands, f32 accumulation, f32 epilogue.
        h1 = jnp.dot(hn.astype(bf16), w1_ref[...],
                     preferred_element_type=f32) + b1_ref[...]
        h1 = jnp.maximum(h1, 0.0)
        h2 = jnp.dot(h1.astype(bf16), w2_ref[...],
                     preferred_element_type=f32) + b2_ref[...]
        h2 = jnp.maximum(h2, 0.0)
        mu = jnp.dot(h2.astype(bf16), w3_ref[...],
                     preferred_element_type=f32) + b3_ref[...]
        mu_ref[...] = jnp.tanh(mu).astype(mu_ref.dtype)


def prepare_params(params, *, block_k=512):
    """Pad + bf16-cast the weights ONCE (hoisted out of the per-call path).

    Returns (prepared_weights_dict, meta_dims_dict)."""
    obs_dim, feature_dim = params["w0"].shape
    hidden_dim = params["w1"].shape[1]
    action_dim = params["w3"].shape[1]

    # K tile for the obs contraction (multiple of 128); pad obs_dim to it.
    TK = min(_round_up(block_k, 128), _round_up(obs_dim, 128))
    Do = _round_up(obs_dim, TK)
    Df = _round_up(feature_dim, 128)
    Dh = _round_up(hidden_dim, 128)
    Da = _round_up(action_dim, 128)

    prepared = dict(
        w0=_pad2(params["w0"], Do, Df).astype(jnp.bfloat16),
        b0=_pad2(params["b0"], 1, Df),
        ln_g=_pad2(params["ln_g"], 1, Df),
        ln_b=_pad2(params["ln_b"], 1, Df),
        w1=_pad2(params["w1"], Df, Dh).astype(jnp.bfloat16),
        b1=_pad2(params["b1"], 1, Dh),
        w2=_pad2(params["w2"], Dh, Dh).astype(jnp.bfloat16),
        b2=_pad2(params["b2"], 1, Dh),
        w3=_pad2(params["w3"], Dh, Da).astype(jnp.bfloat16),
        b3=_pad2(params["b3"], 1, Da),
    )
    meta = dict(obs_dim=obs_dim, feature_dim=feature_dim, hidden_dim=hidden_dim,
                action_dim=action_dim, TK=TK, Do=Do, Df=Df, Dh=Dh, Da=Da)
    return prepared, meta


def actor_forward(obs, std, prepared, meta, *, block_b=256, obs_buffers=2,
                  out_dtype=jnp.float32):
    """Run the Actor forward pass. Returns (mu, std) of the TruncatedNormal.

    obs:      (B, obs_dim) float32
    std:      python/np scalar
    prepared: padded/cast weights from prepare_params
    meta:     dims dict from prepare_params
    """
    B = obs.shape[0]
    TK, Do, Df, Dh, Da = meta["TK"], meta["Do"], meta["Df"], meta["Dh"], meta["Da"]
    feature_dim = meta["feature_dim"]
    action_dim = meta["action_dim"]

    # Batch tile: multiple of 16 (bf16 sublane packing), capped at block_b.
    TB = min(_round_up(block_b, 16), _round_up(B, 16))
    # Prefer >= 2 batch steps so the "parallel" axis can shard across both
    # TensorCores on dual-TC chips (v7x); only when the batch allows it.
    if _round_up(B, 16) >= 32 and _round_up(B, TB) // TB < 2:
        TB = _round_up(-(-_round_up(B, 16) // 2), 16)
    B_pad = _round_up(B, TB)
    grid = (B_pad // TB, Do // TK)

    # Per-call work on the data path only: pad + cast obs.
    obs_p = _pad2(obs.astype(jnp.bfloat16), B_pad, Do)

    weights = [prepared[k] for k in
               ("w0", "b0", "ln_g", "ln_b", "w1", "b1", "w2", "b2", "w3", "b3")]

    # Specs: obs & w0 move with the grid; everything else is VMEM-resident and
    # single-buffered (constant index_map -> fetched exactly once).
    obs_spec = pl.BlockSpec((TB, TK), lambda i, k: (i, k),
                            pipeline_mode=pl.Buffered(obs_buffers))
    w0_spec = pl.BlockSpec((TK, Df), lambda i, k: (k, 0))
    resident = lambda a: pl.BlockSpec(a.shape, lambda i, k: (0, 0),
                                      pipeline_mode=pl.Buffered(1))
    mu_spec = pl.BlockSpec((TB, Da), lambda i, k: (i, 0))
    in_specs = [obs_spec, w0_spec] + [resident(a) for a in weights[1:]]

    # Derive the VMEM limit from the actual buffer set (instead of a fixed
    # 32 MiB), with headroom, clamped to a sane range.
    resident_bytes = sum(a.size * a.dtype.itemsize for a in weights[1:])
    vmem_needed = (obs_buffers * TB * TK * 2       # obs pipeline buffers (bf16)
                   + 2 * TK * Df * 2               # w0 K-blocks (bf16, 2 bufs)
                   + resident_bytes                # single-buffered weights
                   + 2 * TB * Da * 4               # mu output (2 bufs)
                   + TB * Df * 4)                  # accumulator scratch
    vmem_limit = int(min(max(int(vmem_needed * 1.5) + (4 << 20), 16 << 20),
                         96 << 20))

    flops = 2 * B_pad * (Do * Df + Df * Dh + Dh * Dh + Dh * Da)
    bytes_accessed = int(
        obs_p.size * obs_p.dtype.itemsize
        + sum(a.size * a.dtype.itemsize for a in weights)
        + B_pad * Da * jnp.dtype(out_dtype).itemsize
    )
    transcendentals = B_pad * (Df + Da + 1)  # tanh(trunk) + tanh(mu) + rsqrt

    mu_padded = pl.pallas_call(
        functools.partial(_actor_kernel, feature_dim),
        out_shape=jax.ShapeDtypeStruct((B_pad, Da), out_dtype),
        grid_spec=pltpu.PrefetchScalarGridSpec(
            num_scalar_prefetch=0,
            grid=grid,
            in_specs=in_specs,
            out_specs=mu_spec,
            scratch_shapes=[pltpu.VMEM((TB, Df), jnp.float32)],
        ),
        compiler_params=pltpu.CompilerParams(
            dimension_semantics=("parallel", "arbitrary"),
            vmem_limit_bytes=vmem_limit,
        ),
        cost_estimate=pl.CostEstimate(
            flops=flops,
            transcendentals=transcendentals,
            bytes_accessed=bytes_accessed,
        ),
    )(obs_p, *weights)

    mu = mu_padded[:B, :action_dim]
    # std is a constant tensor: build it in the wrapper (no kernel store).
    std_out = jnp.full_like(mu, std)
    return mu, std_out


def init_params(key, obs_dim, action_dim, feature_dim, hidden_dim):
    """Deterministic synthetic init (shapes match Actor.__init__ for 'pixels')."""
    ks = jax.random.split(key, 8)

    def lin(kw, kb, fan_in, fan_out):
        w = jax.random.normal(kw, (fan_in, fan_out), jnp.float32) / jnp.sqrt(fan_in)
        b = 0.01 * jax.random.normal(kb, (1, fan_out), jnp.float32)
        return w, b

    w0, b0 = lin(ks[0], ks[1], obs_dim, feature_dim)
    w1, b1 = lin(ks[2], ks[3], feature_dim, hidden_dim)
    w2, b2 = lin(ks[4], ks[5], hidden_dim, hidden_dim)
    w3, b3 = lin(ks[6], ks[7], hidden_dim, action_dim)
    return dict(
        w0=w0, b0=b0,
        ln_g=jnp.ones((1, feature_dim), jnp.float32),
        ln_b=jnp.zeros((1, feature_dim), jnp.float32),
        w1=w1, b1=b1, w2=w2, b2=b2, w3=w3, b3=b3,
    )


def actor_forward_ref(obs, std, p):
    """Pure-JAX reference mirroring the kernel's numerical path
    (bf16 matmul operands, f32 accumulation/epilogue)."""
    f32 = jnp.float32
    bf = lambda a: a.astype(jnp.bfloat16).astype(f32)
    h = bf(obs) @ bf(p["w0"]) + p["b0"]
    mean = h.mean(-1, keepdims=True)
    var = ((h - mean) ** 2).mean(-1, keepdims=True)
    h = (h - mean) * jax.lax.rsqrt(var + LN_EPS) * p["ln_g"] + p["ln_b"]
    h = jnp.tanh(h)
    h = jnp.maximum(bf(h) @ bf(p["w1"]) + p["b1"], 0.0)
    h = jnp.maximum(bf(h) @ bf(p["w2"]) + p["b2"], 0.0)
    mu = jnp.tanh(bf(h) @ bf(p["w3"]) + p["b3"])
    return mu, jnp.ones_like(mu) * std


if __name__ == "__main__":
    # Small shapes consistent with the module (obs_type='pixels').
    B, obs_dim, feature_dim, hidden_dim, action_dim = 8, 24, 16, 32, 6
    std = 0.2

    key = jax.random.PRNGKey(0)
    k_obs, k_par = jax.random.split(key)
    obs = jax.random.normal(k_obs, (B, obs_dim), jnp.float32)
    params = init_params(k_par, obs_dim, action_dim, feature_dim, hidden_dim)

    # Pad/cast weights once (hoisted out of the forward path).
    prepared, meta = prepare_params(params)

    mu, std_out = actor_forward(obs, std, prepared, meta)
    jax.block_until_ready((mu, std_out))

    mu_ref, std_ref = actor_forward_ref(obs, std, params)
    assert mu.shape == (B, action_dim) and std_out.shape == (B, action_dim)
    assert jnp.allclose(mu, mu_ref, atol=2e-3), "mu mismatch vs reference"
    assert jnp.allclose(std_out, std_ref, atol=1e-6), "std mismatch vs reference"

    # TODO(synk): TruncatedNormal distribution object (sampling / clamping) has
    # no Pallas equivalent; kernel returns its (mu, std) parameters instead.
    print("KERNEL_OK")
</pallas_src>

<mosaic_0001>
module attributes {stable_mosaic.version = 11 : i64} {
  func.func @_actor_kernel(%arg0: i32, %arg1: i32, %arg2: memref<16x128xbf16, #tpu.memory_space<vmem>>, %arg3: memref<128x128xbf16, #tpu.memory_space<vmem>>, %arg4: memref<1x128xf32, #tpu.memory_space<vmem>>, %arg5: memref<1x128xf32, #tpu.memory_space<vmem>>, %arg6: memref<1x128xf32, #tpu.memory_space<vmem>>, %arg7: memref<128x128xbf16, #tpu.memory_space<vmem>>, %arg8: memref<1x128xf32, #tpu.memory_space<vmem>>, %arg9: memref<128x128xbf16, #tpu.memory_space<vmem>>, %arg10: memref<1x128xf32, #tpu.memory_space<vmem>>, %arg11: memref<128x128xbf16, #tpu.memory_space<vmem>>, %arg12: memref<1x128xf32, #tpu.memory_space<vmem>>, %arg13: memref<16x128xf32, #tpu.memory_space<vmem>>, %arg14: memref<16x128xf32, #tpu.memory_space<vmem>>) attributes {dimension_semantics = [#tpu.dimension_semantics<parallel>, #tpu.dimension_semantics<arbitrary>], iteration_bounds = array<i64: 1, 1>, scalar_prefetch = 0 : i64, scratch_operands = 1 : i64, tpu.core_type = #tpu.core_type<tc>, window_params = [{pipeline_mode = #tpu.pipeline_mode<double_buffered>, transform_indices = @transform_0, window_bounds = array<i64: 16, 128>}, {transform_indices = @transform_1, window_bounds = array<i64: 128, 128>}, {pipeline_mode = #tpu.pipeline_mode<synchronous>, transform_indices = @transform_2, window_bounds = array<i64: 1, 128>}, {pipeline_mode = #tpu.pipeline_mode<synchronous>, transform_indices = @transform_3, window_bounds = array<i64: 1, 128>}, {pipeline_mode = #tpu.pipeline_mode<synchronous>, transform_indices = @transform_4, window_bounds = array<i64: 1, 128>}, {pipeline_mode = #tpu.pipeline_mode<synchronous>, transform_indices = @transform_5, window_bounds = array<i64: 128, 128>}, {pipeline_mode = #tpu.pipeline_mode<synchronous>, transform_indices = @transform_6, window_bounds = array<i64: 1, 128>}, {pipeline_mode = #tpu.pipeline_mode<synchronous>, transform_indices = @transform_7, window_bounds = array<i64: 128, 128>}, {pipeline_mode = #tpu.pipeline_mode<synchronous>, transform_indices = @transform_8, window_bounds = array<i64: 1, 128>}, {pipeline_mode = #tpu.pipeline_mode<synchronous>, transform_indices = @transform_9, window_bounds = array<i64: 128, 128>}, {pipeline_mode = #tpu.pipeline_mode<synchronous>, transform_indices = @transform_10, window_bounds = array<i64: 1, 128>}, {transform_indices = @transform_11, window_bounds = array<i64: 16, 128>}]} {
    %c0_i32 = arith.constant 0 : i32
    %0 = arith.cmpi eq, %arg1, %c0_i32 : i32
    %1 = arith.extui %0 : i1 to i32
    %c0_i32_0 = arith.constant 0 : i32
    %2 = arith.cmpi ne, %1, %c0_i32_0 : i32
    scf.if %2 {
      %cst_10 = arith.constant 0.000000e+00 : f32
      %12 = vector.broadcast %cst_10 : f32 to vector<16x128xf32>
      %c0_11 = arith.constant 0 : index
      %c0_12 = arith.constant 0 : index
      %13 = vector.load %arg14[%c0_11, %c0_12] : memref<16x128xf32, #tpu.memory_space<vmem>>, vector<16x128xf32>
      tpu.vector_store %arg14[%c0_11, %c0_12], %12 {strides = array<i32>} : memref<16x128xf32, #tpu.memory_space<vmem>>, vector<16x128xf32>,
    } else {
    }
    %c0 = arith.constant 0 : index
    %c0_1 = arith.constant 0 : index
    %3 = vector.load %arg14[%c0, %c0_1] : memref<16x128xf32, #tpu.memory_space<vmem>>, vector<16x128xf32>
    %c0_2 = arith.constant 0 : index
    %c0_3 = arith.constant 0 : index
    %4 = vector.load %arg2[%c0_2, %c0_3] : memref<16x128xbf16, #tpu.memory_space<vmem>>, vector<16x128xbf16>
    %c0_4 = arith.constant 0 : index
    %c0_5 = arith.constant 0 : index
    %5 = vector.load %arg3[%c0_4, %c0_5] : memref<128x128xbf16, #tpu.memory_space<vmem>>, vector<128x128xbf16>
    %cst = arith.constant dense<0.000000e+00> : vector<16x128xf32>
    %6 = tpu.matmul %4, %5, %cst {dimension_numbers = #tpu.dot_dimension_numbers<[1], [0], [0], [1], [0, 0, 1, 1], [], []>} : vector<16x128xbf16>, vector<128x128xbf16>, vector<16x128xf32> -> vector<16x128xf32>
    %7 = arith.addf %3, %6 : vector<16x128xf32>
    %c0_6 = arith.constant 0 : index
    %c0_7 = arith.constant 0 : index
    %8 = vector.load %arg14[%c0_6, %c0_7] : memref<16x128xf32, #tpu.memory_space<vmem>>, vector<16x128xf32>
    tpu.vector_store %arg14[%c0_6, %c0_7], %7 {strides = array<i32>} : memref<16x128xf32, #tpu.memory_space<vmem>>, vector<16x128xf32>,
    %c0_i32_8 = arith.constant 0 : i32
    %9 = arith.cmpi eq, %arg1, %c0_i32_8 : i32
    %10 = arith.extui %9 : i1 to i32
    %c0_i32_9 = arith.constant 0 : i32
    %11 = arith.cmpi ne, %10, %c0_i32_9 : i32
    scf.if %11 {
      %c0_10 = arith.constant 0 : index
      %c0_11 = arith.constant 0 : index
      %12 = vector.load %arg14[%c0_10, %c0_11] : memref<16x128xf32, #tpu.memory_space<vmem>>, vector<16x128xf32>
      %c0_12 = arith.constant 0 : index
      %c0_13 = arith.constant 0 : index
      %13 = vector.load %arg4[%c0_12, %c0_13] : memref<1x128xf32, #tpu.memory_space<vmem>>, vector<1x128xf32>
      %14 = vector.broadcast %13 : vector<1x128xf32> to vector<16x128xf32>
      %15 = arith.addf %12, %14 : vector<16x128xf32>
      %cst_14 = arith.constant dense<0.000000e+00> : vector<16xf32>
      %16 = vector.multi_reduction <add>, %15, %cst_14 [1] : vector<16x128xf32> to vector<16xf32>
      %17 = vector.shape_cast %16 : vector<16xf32> to vector<16x1xf32>
      %cst_15 = arith.constant 6.250000e-02 : f32
      %18 = vector.broadcast %cst_15 : f32 to vector<16x1xf32>
      %19 = arith.mulf %17, %18 : vector<16x1xf32>
      %20 = arith.mulf %15, %15 : vector<16x128xf32>
      %cst_16 = arith.constant dense<0.000000e+00> : vector<16xf32>
      %21 = vector.multi_reduction <add>, %20, %cst_16 [1] : vector<16x128xf32> to vector<16xf32>
      %22 = vector.shape_cast %21 : vector<16xf32> to vector<16x1xf32>
      %cst_17 = arith.constant 6.250000e-02 : f32
      %23 = vector.broadcast %cst_17 : f32 to vector<16x1xf32>
      %24 = arith.mulf %22, %23 : vector<16x1xf32>
      %25 = arith.mulf %19, %19 : vector<16x1xf32>
      %26 = arith.subf %24, %25 : vector<16x1xf32>
      %cst_18 = arith.constant 0.000000e+00 : f32
      %27 = vector.broadcast %cst_18 : f32 to vector<16x1xf32>
      %28 = arith.maximumf %26, %27 : vector<16x1xf32>
      %29 = vector.broadcast %19 : vector<16x1xf32> to vector<16x128xf32>
      %30 = arith.subf %15, %29 : vector<16x128xf32>
      %cst_19 = arith.constant 9.99999974E-6 : f32
      %31 = vector.broadcast %cst_19 : f32 to vector<16x1xf32>
      %32 = arith.addf %28, %31 : vector<16x1xf32>
      %33 = math.rsqrt %32 : vector<16x1xf32>
      %34 = vector.broadcast %33 : vector<16x1xf32> to vector<16x128xf32>
      %35 = arith.mulf %30, %34 : vector<16x128xf32>
      %c0_20 = arith.constant 0 : index
      %c0_21 = arith.constant 0 : index
      %36 = vector.load %arg5[%c0_20, %c0_21] : memref<1x128xf32, #tpu.memory_space<vmem>>, vector<1x128xf32>
      %37 = vector.broadcast %36 : vector<1x128xf32> to vector<16x128xf32>
      %38 = arith.mulf %35, %37 : vector<16x128xf32>
      %c0_22 = arith.constant 0 : index
      %c0_23 = arith.constant 0 : index
      %39 = vector.load %arg6[%c0_22, %c0_23] : memref<1x128xf32, #tpu.memory_space<vmem>>, vector<1x128xf32>
      %40 = vector.broadcast %39 : vector<1x128xf32> to vector<16x128xf32>
      %41 = arith.addf %38, %40 : vector<16x128xf32>
      %42 = math.tanh %41 : vector<16x128xf32>
      %43 = arith.truncf %42 : vector<16x128xf32> to vector<16x128xbf16>
      %c0_24 = arith.constant 0 : index
      %c0_25 = arith.constant 0 : index
      %44 = vector.load %arg7[%c0_24, %c0_25] : memref<128x128xbf16, #tpu.memory_space<vmem>>, vector<128x128xbf16>
      %cst_26 = arith.constant dense<0.000000e+00> : vector<16x128xf32>
      %45 = tpu.matmul %43, %44, %cst_26 {dimension_numbers = #tpu.dot_dimension_numbers<[1], [0], [0], [1], [0, 0, 1, 1], [], []>} : vector<16x128xbf16>, vector<128x128xbf16>, vector<16x128xf32> -> vector<16x128xf32>
      %c0_27 = arith.constant 0 : index
      %c0_28 = arith.constant 0 : index
      %46 = vector.load %arg8[%c0_27, %c0_28] : memref<1x128xf32, #tpu.memory_space<vmem>>, vector<1x128xf32>
      %47 = vector.broadcast %46 : vector<1x128xf32> to vector<16x128xf32>
      %48 = arith.addf %45, %47 : vector<16x128xf32>
      %cst_29 = arith.constant 0.000000e+00 : f32
      %49 = vector.broadcast %cst_29 : f32 to vector<16x128xf32>
      %50 = arith.maximumf %48, %49 : vector<16x128xf32>
      %51 = arith.truncf %50 : vector<16x128xf32> to vector<16x128xbf16>
      %c0_30 = arith.constant 0 : index
      %c0_31 = arith.constant 0 : index
      %52 = vector.load %arg9[%c0_30, %c0_31] : memref<128x128xbf16, #tpu.memory_space<vmem>>, vector<128x128xbf16>
      %cst_32 = arith.constant dense<0.000000e+00> : vector<16x128xf32>
      %53 = tpu.matmul %51, %52, %cst_32 {dimension_numbers = #tpu.dot_dimension_numbers<[1], [0], [0], [1], [0, 0, 1, 1], [], []>} : vector<16x128xbf16>, vector<128x128xbf16>, vector<16x128xf32> -> vector<16x128xf32>
      %c0_33 = arith.constant 0 : index
      %c0_34 = arith.constant 0 : index
      %54 = vector.load %arg10[%c0_33, %c0_34] : memref<1x128xf32, #tpu.memory_space<vmem>>, vector<1x128xf32>
      %55 = vector.broadcast %54 : vector<1x128xf32> to vector<16x128xf32>
      %56 = arith.addf %53, %55 : vector<16x128xf32>
      %cst_35 = arith.constant 0.000000e+00 : f32
      %57 = vector.broadcast %cst_35 : f32 to vector<16x128xf32>
      %58 = arith.maximumf %56, %57 : vector<16x128xf32>
      %59 = arith.truncf %58 : vector<16x128xf32> to vector<16x128xbf16>
      %c0_36 = arith.constant 0 : index
      %c0_37 = arith.constant 0 : index
      %60 = vector.load %arg11[%c0_36, %c0_37] : memref<128x128xbf16, #tpu.memory_space<vmem>>, vector<128x128xbf16>
      %cst_38 = arith.constant dense<0.000000e+00> : vector<16x128xf32>
      %61 = tpu.matmul %59, %60, %cst_38 {dimension_numbers = #tpu.dot_dimension_numbers<[1], [0], [0], [1], [0, 0, 1, 1], [], []>} : vector<16x128xbf16>, vector<128x128xbf16>, vector<16x128xf32> -> vector<16x128xf32>
      %c0_39 = arith.constant 0 : index
      %c0_40 = arith.constant 0 : index
      %62 = vector.load %arg12[%c0_39, %c0_40] : memref<1x128xf32, #tpu.memory_space<vmem>>, vector<1x128xf32>
      %63 = vector.broadcast %62 : vector<1x128xf32> to vector<16x128xf32>
      %64 = arith.addf %61, %63 : vector<16x128xf32>
      %65 = math.tanh %64 : vector<16x128xf32>
      %c0_41 = arith.constant 0 : index
      %c0_42 = arith.constant 0 : index
      %66 = vector.load %arg13[%c0_41, %c0_42] : memref<16x128xf32, #tpu.memory_space<vmem>>, vector<16x128xf32>
      tpu.vector_store %arg13[%c0_41, %c0_42], %65 {strides = array<i32>} : memref<16x128xf32, #tpu.memory_space<vmem>>, vector<16x128xf32>,
    } else {
    }
    return
  }
  func.func @transform_0(%arg0: i32, %arg1: i32) -> (i32, i32) {
    %c0_i32 = arith.constant 0 : i32
    return %arg0, %arg1 : i32, i32
  }
  func.func @transform_1(%arg0: i32, %arg1: i32) -> (i32, i32) {
    %c0_i32 = arith.constant 0 : i32
    %c0_i32_0 = arith.constant 0 : i32
    return %arg1, %c0_i32 : i32, i32
  }
  func.func @transform_2(%arg0: i32, %arg1: i32) -> (i32, i32) {
    %c0_i32 = arith.constant 0 : i32
    %c0_i32_0 = arith.constant 0 : i32
    %c0_i32_1 = arith.constant 0 : i32
    return %c0_i32, %c0_i32_0 : i32, i32
  }
  func.func @transform_3(%arg0: i32, %arg1: i32) -> (i32, i32) {
    %c0_i32 = arith.constant 0 : i32
    %c0_i32_0 = arith.constant 0 : i32
    %c0_i32_1 = arith.constant 0 : i32
    return %c0_i32, %c0_i32_0 : i32, i32
  }
  func.func @transform_4(%arg0: i32, %arg1: i32) -> (i32, i32) {
    %c0_i32 = arith.constant 0 : i32
    %c0_i32_0 = arith.constant 0 : i32
    %c0_i32_1 = arith.constant 0 : i32
    return %c0_i32, %c0_i32_0 : i32, i32
  }
  func.func @transform_5(%arg0: i32, %arg1: i32) -> (i32, i32) {
    %c0_i32 = arith.constant 0 : i32
    %c0_i32_0 = arith.constant 0 : i32
    %c0_i32_1 = arith.constant 0 : i32
    return %c0_i32, %c0_i32_0 : i32, i32
  }
  func.func @transform_6(%arg0: i32, %arg1: i32) -> (i32, i32) {
    %c0_i32 = arith.constant 0 : i32
    %c0_i32_0 = arith.constant 0 : i32
    %c0_i32_1 = arith.constant 0 : i32
    return %c0_i32, %c0_i32_0 : i32, i32
  }
  func.func @transform_7(%arg0: i32, %arg1: i32) -> (i32, i32) {
    %c0_i32 = arith.constant 0 : i32
    %c0_i32_0 = arith.constant 0 : i32
    %c0_i32_1 = arith.constant 0 : i32
    return %c0_i32, %c0_i32_0 : i32, i32
  }
  func.func @transform_8(%arg0: i32, %arg1: i32) -> (i32, i32) {
    %c0_i32 = arith.constant 0 : i32
    %c0_i32_0 = arith.constant 0 : i32
    %c0_i32_1 = arith.constant 0 : i32
    return %c0_i32, %c0_i32_0 : i32, i32
  }
  func.func @transform_9(%arg0: i32, %arg1: i32) -> (i32, i32) {
    %c0_i32 = arith.constant 0 : i32
    %c0_i32_0 = arith.constant 0 : i32
    %c0_i32_1 = arith.constant 0 : i32
    return %c0_i32, %c0_i32_0 : i32, i32
  }
  func.func @transform_10(%arg0: i32, %arg1: i32) -> (i32, i32) {
    %c0_i32 = arith.constant 0 : i32
    %c0_i32_0 = arith.constant 0 : i32
    %c0_i32_1 = arith.constant 0 : i32
    return %c0_i32, %c0_i32_0 : i32, i32
  }
  func.func @transform_11(%arg0: i32, %arg1: i32) -> (i32, i32) {
    %c0_i32 = arith.constant 0 : i32
    %c0_i32_0 = arith.constant 0 : i32
    return %arg0, %c0_i32 : i32, i32
  }
}

</mosaic_0001>

<llo_original>
// kernel: tpu_custom_call.1
$region0: #{tpu_custom_call.1}
  #allocation0 [shape = 'u32[]', space=smem, size = 0x4, offset = 0x4, fixed_abs, tag = 'smem constant byte address 0x4 - core index']
  #allocation1 [shape = 'u32[144,128]{1,0:T(1,128)}', space=vmem, size = 0x12000, scoped, tag = 'internal scratch']
  #allocation2 [shape = 'f32[16,128]{1,0:T(8,128)}', space=vmem, size = 0x2000, scoped, tag = 'scratch operand']
  %s0 = inlined_call_operand.hbm [shape: bf16[16,128], index: 0, kind: input, shape index: {}]
  %s1 = inlined_call_operand.hbm [shape: bf16[128,128], index: 1, kind: input, shape index: {}]
  %s2 = inlined_call_operand.vmem [shape: f32[1,128], index: 2, kind: input, shape index: {}]
  %s3 = inlined_call_operand.vmem [shape: f32[1,128], index: 3, kind: input, shape index: {}]
  %s4 = inlined_call_operand.vmem [shape: f32[1,128], index: 4, kind: input, shape index: {}]
  %s5 = inlined_call_operand.hbm [shape: bf16[128,128], index: 5, kind: input, shape index: {}]
  %s6 = inlined_call_operand.vmem [shape: f32[1,128], index: 6, kind: input, shape index: {}]
  %s7 = inlined_call_operand.hbm [shape: bf16[128,128], index: 7, kind: input, shape index: {}]
  %s8 = inlined_call_operand.vmem [shape: f32[1,128], index: 8, kind: input, shape index: {}]
  %s9 = inlined_call_operand.hbm [shape: bf16[128,128], index: 9, kind: input, shape index: {}]
  %s10 = inlined_call_operand.vmem [shape: f32[1,128], index: 10, kind: input, shape index: {}]
  %s11 = inlined_call_operand.hbm [shape: f32[16,128], index: 11, kind: output, shape index: {}]
  %s12 = sld [smem:[#allocation0]]
  $region82: #{tpu_custom_call.1} parent=0
    _
  %s14 = ssub.s32 1, %s12
  %s15 = scalar_select 0, %s14, %s12
  $region1: #{tpu_custom_call.1} parent=0
    #allocation3 [shape = 'u8[4096]{0}', space=vmem, size = 0x1000, scoped, tag = 'input window, operand 0, single buffered']
    #allocation4 [shape = 's32[1]{0}', space=sflag, size = 0x4, scoped, tag = 'scoped memory for tpu_custom_call.1']
    #allocation5 [shape = 's32[1]{0}', space=sflag, size = 0x4, scoped, tag = 'scoped memory for tpu_custom_call.1']
    #allocation6 [shape = 'u8[32768]{0}', space=vmem, size = 0x8000, scoped, tag = 'input window, operand 1, single buffered']
    #allocation7 [shape = 's32[1]{0}', space=sflag, size = 0x4, scoped, tag = 'scoped memory for tpu_custom_call.1']
    #allocation8 [shape = 'u8[32768]{0}', space=vmem, size = 0x8000, scoped, tag = 'input window, operand 5, single buffered']
    #allocation9 [shape = 'u8[32768]{0}', space=vmem, size = 0x8000, scoped, tag = 'input window, operand 7, single buffered']
    #allocation10 [shape = 's32[1]{0}', space=sflag, size = 0x4, scoped, tag = 'scoped memory for tpu_custom_call.1']
    #allocation11 [shape = 'u8[32768]{0}', space=vmem, size = 0x8000, scoped, tag = 'input window, operand 9, single buffered']
    #allocation12 [shape = 'u8[8192]{0}', space=vmem, size = 0x2000, scoped, tag = 'output window, operand 0, single buffered']
    %16 = vsyncpa [#allocation4], 0
    %17 = vsyncpa [#allocation7], 0
    %18 = vsyncpa [#allocation10], 0
    %19 = vsyncpa [#allocation5], 0
    // Predicated region
    $region2: #{tpu_custom_call.1} parent=1 // pred_check
      _
    $region3: #{tpu_custom_call.1} parent=1 // pred_check_branch
      %21 = sbr.rel (0) target = $region5
    $region4: #{tpu_custom_call.1} parent=1 // pred_region
      %s23 = ssub.s32 128, 128
      %24 = vsyncadd [#allocation4], %s23
      %s25 = sshll.u32 [#allocation3], 4
      %s26 = int_to_ptr.vmem [resolvable:$true] %s25
      %31 = dma.hbm_to_vmem [thread:$0]  %s0, 128, %s26, [#allocation4], 64, 64, 4
    $region5: #{tpu_custom_call.1} parent=1 // pred_fallthru
      _
    // Predicated region
    $region6: #{tpu_custom_call.1} parent=1 // pred_check
      _
    $region7: #{tpu_custom_call.1} parent=1 // pred_check_branch
      %33 = sbr.rel (0) target = $region9
    $region8: #{tpu_custom_call.1} parent=1 // pred_region
      %s35 = ssub.s32 1024, 1024
      %36 = vsyncadd [#allocation7], %s35
      %s37 = sshll.u32 [#allocation6], 4
      %s38 = int_to_ptr.vmem [resolvable:$true] %s37
      %43 = dma.hbm_to_vmem [thread:$0]  %s1, 1024, %s38, [#allocation7], 64, 64, 4
    $region9: #{tpu_custom_call.1} parent=1 // pred_fallthru
      _
    // Predicated region
    $region10: #{tpu_custom_call.1} parent=1 // pred_check
      _
    $region11: #{tpu_custom_call.1} parent=1 // pred_check_branch
      %45 = sbr.rel (0) target = $region13
    $region12: #{tpu_custom_call.1} parent=1 // pred_region
      _
    $region13: #{tpu_custom_call.1} parent=1 // pred_fallthru
      _
    // Predicated region
    $region14: #{tpu_custom_call.1} parent=1 // pred_check
      _
    $region15: #{tpu_custom_call.1} parent=1 // pred_check_branch
      %47 = sbr.rel (0) target = $region17
    $region16: #{tpu_custom_call.1} parent=1 // pred_region
      _
    $region17: #{tpu_custom_call.1} parent=1 // pred_fallthru
      _
    // Predicated region
    $region18: #{tpu_custom_call.1} parent=1 // pred_check
      _
    $region19: #{tpu_custom_call.1} parent=1 // pred_check_branch
      %49 = sbr.rel (0) target = $region21
    $region20: #{tpu_custom_call.1} parent=1 // pred_region
      _
    $region21: #{tpu_custom_call.1} parent=1 // pred_fallthru
      _
    // Predicated region
    $region22: #{tpu_custom_call.1} parent=1 // pred_check
      _
    $region23: #{tpu_custom_call.1} parent=1 // pred_check_branch
      %51 = sbr.rel (0) target = $region25
    $region24: #{tpu_custom_call.1} parent=1 // pred_region
      %s53 = ssub.s32 1024, 1024
      %54 = vsyncadd [#allocation7], %s53
      %s55 = sshll.u32 [#allocation8], 4
      %s56 = int_to_ptr.vmem [resolvable:$true] %s55
      %61 = dma.hbm_to_vmem [thread:$0]  %s5, 1024, %s56, [#allocation7], 64, 64, 4
    $region25: #{tpu_custom_call.1} parent=1 // pred_fallthru
      _
    // Predicated region
    $region26: #{tpu_custom_call.1} parent=1 // pred_check
      _
    $region27: #{tpu_custom_call.1} parent=1 // pred_check_branch
      %63 = sbr.rel (0) target = $region29
    $region28: #{tpu_custom_call.1} parent=1 // pred_region
      _
    $region29: #{tpu_custom_call.1} parent=1 // pred_fallthru
      _
    // Predicated region
    $region30: #{tpu_custom_call.1} parent=1 // pred_check
      _
    $region31: #{tpu_custom_call.1} parent=1 // pred_check_branch
      %65 = sbr.rel (0) target = $region33
    $region32: #{tpu_custom_call.1} parent=1 // pred_region
      %s67 = ssub.s32 1024, 1024
      %68 = vsyncadd [#allocation10], %s67
      %s69 = sshll.u32 [#allocation9], 4
      %s70 = int_to_ptr.vmem [resolvable:$true] %s69
      %75 = dma.hbm_to_vmem [thread:$0]  %s7, 1024, %s70, [#allocation10], 64, 64, 4
    $region33: #{tpu_custom_call.1} parent=1 // pred_fallthru
      _
    // Predicated region
    $region34: #{tpu_custom_call.1} parent=1 // pred_check
      _
    $region35: #{tpu_custom_call.1} parent=1 // pred_check_branch
      %77 = sbr.rel (0) target = $region37
    $region36: #{tpu_custom_call.1} parent=1 // pred_region
      _
    $region37: #{tpu_custom_call.1} parent=1 // pred_fallthru
      _
    // Predicated region
    $region38: #{tpu_custom_call.1} parent=1 // pred_check
      _
    $region39: #{tpu_custom_call.1} parent=1 // pred_check_branch
      %79 = sbr.rel (0) target = $region41
    $region40: #{tpu_custom_call.1} parent=1 // pred_region
      %s81 = ssub.s32 1024, 1024
      %82 = vsyncadd [#allocation10], %s81
      %s83 = sshll.u32 [#allocation11], 4
      %s84 = int_to_ptr.vmem [resolvable:$true] %s83
      %89 = dma.hbm_to_vmem [thread:$0]  %s9, 1024, %s84, [#allocation10], 64, 64, 4
    $region41: #{tpu_custom_call.1} parent=1 // pred_fallthru
      _
    // Predicated region
    $region42: #{tpu_custom_call.1} parent=1 // pred_check
      _
    $region43: #{tpu_custom_call.1} parent=1 // pred_check_branch
      %91 = sbr.rel (0) target = $region45
    $region44: #{tpu_custom_call.1} parent=1 // pred_region
      _
    $region45: #{tpu_custom_call.1} parent=1 // pred_fallthru
      _
    // Predicated region
    $region46: #{tpu_custom_call.1} parent=1 // pred_check
      _
    $region47: #{tpu_custom_call.1} parent=1 // pred_check_branch
      %93 = sbr.rel (0) target = $region49
    $region48: #{tpu_custom_call.1} parent=1 // pred_region
      %94 = dma.done [#allocation4], 128
    $region49: #{tpu_custom_call.1} parent=1 // pred_fallthru
      _
    // Predicated region
    $region50: #{tpu_custom_call.1} parent=1 // pred_check
      _
    $region51: #{tpu_custom_call.1} parent=1 // pred_check_branch
      %96 = sbr.rel (0) target = $region53
    $region52: #{tpu_custom_call.1} parent=1 // pred_region
      %97 = dma.done [#allocation7], 1024
    $region53: #{tpu_custom_call.1} parent=1 // pred_fallthru
      _
    // Predicated region
    $region54: #{tpu_custom_call.1} parent=1 // pred_check
      _
    $region55: #{tpu_custom_call.1} parent=1 // pred_check_branch
      %99 = sbr.rel (0) target = $region57
    $region56: #{tpu_custom_call.1} parent=1 // pred_region
      %100 = dma.done [#allocation7], 1024
    $region57: #{tpu_custom_call.1} parent=1 // pred_fallthru
      _
    // Predicated region
    $region58: #{tpu_custom_call.1} parent=1 // pred_check
      _
    $region59: #{tpu_custom_call.1} parent=1 // pred_check_branch
      %102 = sbr.rel (0) target = $region61
    $region60: #{tpu_custom_call.1} parent=1 // pred_region
      %103 = dma.done [#allocation10], 1024
    $region61: #{tpu_custom_call.1} parent=1 // pred_fallthru
      _
    // Predicated region
    $region62: #{tpu_custom_call.1} parent=1 // pred_check
      _
    $region63: #{tpu_custom_call.1} parent=1 // pred_check_branch
      %105 = sbr.rel (0) target = $region65
    $region64: #{tpu_custom_call.1} parent=1 // pred_region
      %106 = dma.done [#allocation10], 1024
    $region65: #{tpu_custom_call.1} parent=1 // pred_fallthru
      _
    %p108 = scmp.eq.s32.totalorder 0, 0
    // Predicated region
    $region66: #{tpu_custom_call.1} parent=1 // pred_check
      %p109 = pneg %p108
    $region67: #{tpu_custom_call.1} parent=1 // pred_check_branch
      %111 = sbr.rel (%p109) target = $region69
    $region68: #{tpu_custom_call.1} parent=1 // pred_region
      %112 = vst [vmem:[#allocation2] sm:$0xff] 0.0
      %113 = vst [vmem:[#allocation2 + $0x8] sm:$0xff] 0.0
    $region69: #{tpu_custom_call.1} parent=1 // pred_fallthru
      _
    %v114 = vld [vmem:[#allocation2] sm:$0xff]
    %v115 = vld [vmem:[#allocation2 + $0x8] sm:$0xff]
    %v116 = vld [vmem:[#allocation3] sm:$0xf]
    %v117 = vld [vmem:[#allocation3 + $0x4] sm:$0xf]
    %v118 = vld [vmem:[#allocation6] sm:$0xf]
    %v119 = vld [vmem:[#allocation6 + $0x4] sm:$0xf]
    %v120 = vld [vmem:[#allocation6 + $0x8] sm:$0xf]
    %v121 = vld [vmem:[#allocation6 + $0xc] sm:$0xf]
    %v122 = vld [vmem:[#allocation6 + $0x10] sm:$0xf]
    %v123 = vld [vmem:[#allocation6 + $0x14] sm:$0xf]
    %v124 = vld [vmem:[#allocation6 + $0x18] sm:$0xf]
    %v125 = vld [vmem:[#allocation6 + $0x1c] sm:$0xf]
    %v126 = vld [vmem:[#allocation6 + $0x20] sm:$0xf]
    %v127 = vld [vmem:[#allocation6 + $0x24] sm:$0xf]
    %v128 = vld [vmem:[#allocation6 + $0x28] sm:$0xf]
    %v129 = vld [vmem:[#allocation6 + $0x2c] sm:$0xf]
    %v130 = vld [vmem:[#allocation6 + $0x30] sm:$0xf]
    %v131 = vld [vmem:[#allocation6 + $0x34] sm:$0xf]
    %v132 = vld [vmem:[#allocation6 + $0x38] sm:$0xf]
    %v133 = vld [vmem:[#allocation6 + $0x3c] sm:$0xf]
    %v136 = vunpack.c.l.b16 %v116
    %v137 = vunpack.c.l.b16 %v117
    %v138 = vpack.c.b16 %v137, %v136
    %v156 = vunpack.c.l.b16 %v118
    %v157 = vunpack.c.l.b16 %v119
    %v158 = vunpack.c.l.b16 %v120
    %v159 = vunpack.c.l.b16 %v121
    %v160 = vunpack.c.l.b16 %v122
    %v161 = vunpack.c.l.b16 %v123
    %v162 = vunpack.c.l.b16 %v124
    %v163 = vunpack.c.l.b16 %v125
    %v164 = vunpack.c.l.b16 %v126
    %v165 = vunpack.c.l.b16 %v127
    %v166 = vunpack.c.l.b16 %v128
    %v167 = vunpack.c.l.b16 %v129
    %v168 = vunpack.c.l.b16 %v130
    %v169 = vunpack.c.l.b16 %v131
    %v170 = vunpack.c.l.b16 %v132
    %v171 = vunpack.c.l.b16 %v133
    %v172 = vpack.c.b16 %v157, %v156
    %v173 = vpack.c.b16 %v159, %v158
    %v174 = vpack.c.b16 %v161, %v160
    %v175 = vpack.c.b16 %v163, %v162
    %v176 = vpack.c.b16 %v165, %v164
    %v177 = vpack.c.b16 %v167, %v166
    %v178 = vpack.c.b16 %v169, %v168
    %v179 = vpack.c.b16 %v171, %v170
    %188 = vmatprep.subr.bf16.mxu0 0
    %189 = vmatpush1.bf16.msra.mxu0 %v172
    %190 = vmatprep.subr.bf16.mxu0 0
    %191 = vmatpush1.bf16.msra.mxu0 %v173
    %192 = vmatprep.subr.bf16.mxu0 0
    %193 = vmatpush1.bf16.msra.mxu0 %v174
    %194 = vmatprep.subr.bf16.mxu0 0
    %195 = vmatpush1.bf16.msra.mxu0 %v175
    %196 = vmatprep.subr.bf16.mxu0 0
    %197 = vmatpush1.bf16.msra.mxu0 %v176
    %198 = vmatprep.subr.bf16.mxu0 0
    %199 = vmatpush1.bf16.msra.mxu0 %v177
    %200 = vmatprep.subr.bf16.mxu0 0
    %201 = vmatpush1.bf16.msra.mxu0 %v178
    %202 = vmatprep.subr.bf16.mxu0 0
    %203 = vmatpush1.bf16.msra.mxu0 %v179
    %204 = vmatprep.subr.bf16.mxu0 0
    %205 = vmatpush1.bf16.msra.mxu0 0
    %206 = vmatprep.subr.bf16.mxu0 0
    %207 = vmatpush1.bf16.msra.mxu0 0
    %208 = vmatprep.subr.bf16.mxu0 0
    %209 = vmatpush1.bf16.msra.mxu0 0
    %210 = vmatprep.subr.bf16.mxu0 0
    %211 = vmatpush1.bf16.msra.mxu0 0
    %212 = vmatprep.subr.bf16.mxu0 0
    %213 = vmatpush1.bf16.msra.mxu0 0
    %214 = vmatprep.subr.bf16.mxu0 0
    %215 = vmatpush1.bf16.msra.mxu0 0
    %216 = vmatprep.subr.bf16.mxu0 0
    %217 = vmatpush1.bf16.msra.mxu0 0
    %218 = vmatprep.subr.bf16.mxu0 0
    %219 = vmatpush1.bf16.msra.mxu0 0
    %220 = vmatprep.mubr.bf16.mxu0 0
    %221 = vmatmul.mubr.bf16.gmra.mrb[0].mxu0 %v138
    %v222 = vpop.f32.mrb[0].mxu0
    %v223 = vadd.f32 0.0, %v222
    %v224 = vpop.f32.mrb[0].mxu0
    %v225 = vpop.f32.mrb[0].mxu0
    %v226 = vadd.f32 0.0, %v225
    %v227 = vpop.f32.mrb[0].mxu0
    %228 = vdwg.mxu0
    %v229 = vadd.f32 %v114, %v223
    %v230 = vadd.f32 %v115, %v226
    %231 = vst [vmem:[#allocation2] sm:$0xff] %v229
    %232 = vst [vmem:[#allocation2 + $0x8] sm:$0xff] %v230
    // Predicated region
    $region70: #{tpu_custom_call.1} parent=1 // pred_check
      %p233 = pneg %p108
    $region71: #{tpu_custom_call.1} parent=1 // pred_check_branch
      %235 = sbr.rel (%p233) target = $region73
    $region72: #{tpu_custom_call.1} parent=1 // pred_region
      %v236 = vld [vmem:[#allocation2] sm:$0xff]
      %v237 = vld [vmem:[#allocation2 + $0x8] sm:$0xff]
      %v238 = vld [vmem:[%s2] sm:$0x1]
      %v240 = vlaneseq
      %v241 = vshrl.u32 %v240, 7
      %v242 = vsub.s32 0, %v241
      %v243 = vrot.slane %v238, %v242
      %v245 = vadd.f32 %v236, %v243
      %v246 = vadd.f32 %v237, %v243
      %247 = vadd.xlane.f32.xlu0 %v245
      %v248 = vpop.xlane.xlu0 %247
      %249 = vadd.xlane.f32.xlu0 %v246
      %v250 = vpop.xlane.xlu0 %249
      %v251 = vmul.f32 %v248, 0.0625
      %v252 = vmul.f32 %v250, 0.0625
      %v253 = vmul.f32 %v245, %v245
      %v254 = vmul.f32 %v246, %v246
      %255 = vadd.xlane.f32.xlu0 %v253
      %v256 = vpop.xlane.xlu0 %255
      %257 = vadd.xlane.f32.xlu0 %v254
      %v258 = vpop.xlane.xlu0 %257
      %v259 = vmul.f32 %v256, 0.0625
      %v260 = vmul.f32 %v258, 0.0625
      %v261 = vmul.f32 %v251, %v251
      %v262 = vmul.f32 %v252, %v252
      %v263 = vsub.f32 %v259, %v261
      %v264 = vsub.f32 %v260, %v262
      %v265 = vmax.f32 %v263, 0.0
      %v266 = vmax.f32 %v264, 0.0
      %v267 = vsub.f32 %v245, %v251
      %v268 = vsub.f32 %v246, %v252
      %v269 = vadd.f32 %v265, 1e-05
      %v270 = vadd.f32 %v266, 1e-05
      %v271 = vrsqrt.pop %v269
      %v272 = vrsqrt.pop %v270
      %v273 = vmul.f32 %v267, %v271
      %v274 = vmul.f32 %v268, %v272
      %v275 = vld [vmem:[%s3] sm:$0x1]
      %v277 = vlaneseq
      %v278 = vshrl.u32 %v277, 7
      %v279 = vsub.s32 0, %v278
      %v280 = vrot.slane %v275, %v279
      %v282 = vmul.f32 %v273, %v280
      %v283 = vmul.f32 %v274, %v280
      %v284 = vld [vmem:[%s4] sm:$0x1]
      %v286 = vlaneseq
      %v287 = vshrl.u32 %v286, 7
      %v288 = vsub.s32 0, %v287
      %v289 = vrot.slane %v284, %v288
      %v291 = vadd.f32 %v282, %v289
      %v292 = vadd.f32 %v283, %v289
      %v293 = vtanh.pop %v291
      %v294 = vtanh.pop %v292
      %v295 = vpack.c.bf16 %v294, %v293
      %v296 = vld [vmem:[#allocation8] sm:$0xf]
      %v297 = vld [vmem:[#allocation8 + $0x4] sm:$0xf]
      %v298 = vld [vmem:[#allocation8 + $0x8] sm:$0xf]
      %v299 = vld [vmem:[#allocation8 + $0xc] sm:$0xf]
      %v300 = vld [vmem:[#allocation8 + $0x10] sm:$0xf]
      %v301 = vld [vmem:[#allocation8 + $0x14] sm:$0xf]
      %v302 = vld [vmem:[#allocation8 + $0x18] sm:$0xf]
      %v303 = vld [vmem:[#allocation8 + $0x1c] sm:$0xf]
      %v304 = vld [vmem:[#allocation8 + $0x20] sm:$0xf]
      %v305 = vld [vmem:[#allocation8 + $0x24] sm:$0xf]
      %v306 = vld [vmem:[#allocation8 + $0x28] sm:$0xf]
      %v307 = vld [vmem:[#allocation8 + $0x2c] sm:$0xf]
      %v308 = vld [vmem:[#allocation8 + $0x30] sm:$0xf]
      %v309 = vld [vmem:[#allocation8 + $0x34] sm:$0xf]
      %v310 = vld [vmem:[#allocation8 + $0x38] sm:$0xf]
      %v311 = vld [vmem:[#allocation8 + $0x3c] sm:$0xf]
      %v312 = vld [vmem:[%s6] sm:$0x1]
      %v314 = vlaneseq
      %v315 = vshrl.u32 %v314, 7
      %v316 = vsub.s32 0, %v315
      %v317 = vrot.slane %v312, %v316
      %v335 = vunpack.c.l.b16 %v296
      %v336 = vunpack.c.l.b16 %v297
      %v337 = vunpack.c.l.b16 %v298
      %v338 = vunpack.c.l.b16 %v299
      %v339 = vunpack.c.l.b16 %v300
      %v340 = vunpack.c.l.b16 %v301
      %v341 = vunpack.c.l.b16 %v302
      %v342 = vunpack.c.l.b16 %v303
      %v343 = vunpack.c.l.b16 %v304
      %v344 = vunpack.c.l.b16 %v305
      %v345 = vunpack.c.l.b16 %v306
      %v346 = vunpack.c.l.b16 %v307
      %v347 = vunpack.c.l.b16 %v308
      %v348 = vunpack.c.l.b16 %v309
      %v349 = vunpack.c.l.b16 %v310
      %v350 = vunpack.c.l.b16 %v311
      %v351 = vpack.c.b16 %v336, %v335
      %v352 = vpack.c.b16 %v338, %v337
      %v353 = vpack.c.b16 %v340, %v339
      %v354 = vpack.c.b16 %v342, %v341
      %v355 = vpack.c.b16 %v344, %v343
      %v356 = vpack.c.b16 %v346, %v345
      %v357 = vpack.c.b16 %v348, %v347
      %v358 = vpack.c.b16 %v350, %v349
      %367 = vmatprep.subr.bf16.mxu0 0
      %368 = vmatpush1.bf16.msra.mxu0 %v351
      %369 = vmatprep.subr.bf16.mxu0 0
      %370 = vmatpush1.bf16.msra.mxu0 %v352
      %371 = vmatprep.subr.bf16.mxu0 0
      %372 = vmatpush1.bf16.msra.mxu0 %v353
      %373 = vmatprep.subr.bf16.mxu0 0
      %374 = vmatpush1.bf16.msra.mxu0 %v354
      %375 = vmatprep.subr.bf16.mxu0 0
      %376 = vmatpush1.bf16.msra.mxu0 %v355
      %377 = vmatprep.subr.bf16.mxu0 0
      %378 = vmatpush1.bf16.msra.mxu0 %v356
      %379 = vmatprep.subr.bf16.mxu0 0
      %380 = vmatpush1.bf16.msra.mxu0 %v357
      %381 = vmatprep.subr.bf16.mxu0 0
      %382 = vmatpush1.bf16.msra.mxu0 %v358
      %383 = vmatprep.subr.bf16.mxu0 0
      %384 = vmatpush1.bf16.msra.mxu0 0
      %385 = vmatprep.subr.bf16.mxu0 0
      %386 = vmatpush1.bf16.msra.mxu0 0
      %387 = vmatprep.subr.bf16.mxu0 0
      %388 = vmatpush1.bf16.msra.mxu0 0
      %389 = vmatprep.subr.bf16.mxu0 0
      %390 = vmatpush1.bf16.msra.mxu0 0
      %391 = vmatprep.subr.bf16.mxu0 0
      %392 = vmatpush1.bf16.msra.mxu0 0
      %393 = vmatprep.subr.bf16.mxu0 0
      %394 = vmatpush1.bf16.msra.mxu0 0
      %395 = vmatprep.subr.bf16.mxu0 0
      %396 = vmatpush1.bf16.msra.mxu0 0
      %397 = vmatprep.subr.bf16.mxu0 0
      %398 = vmatpush1.bf16.msra.mxu0 0
      %399 = vmatprep.mubr.bf16.mxu0 0
      %400 = vmatmul.mubr.bf16.gmra.mrb[0].mxu0 %v295
      %v401 = vpop.f32.mrb[0].mxu0
      %v402 = vadd.f32 %v317, %v401
      %v403 = vpop.f32.mrb[0].mxu0
      %v404 = vpop.f32.mrb[0].mxu0
      %v405 = vadd.f32 %v317, %v404
      %v406 = vpop.f32.mrb[0].mxu0
      %407 = vdwg.mxu0
      %v408 = vmax.f32 %v402, 0.0
      %v409 = vmax.f32 %v405, 0.0
      %v410 = vpack.c.bf16 %v409, %v408
      %v411 = vld [vmem:[#allocation9] sm:$0xf]
      %v412 = vld [vmem:[#allocation9 + $0x4] sm:$0xf]
      %v413 = vld [vmem:[#allocation9 + $0x8] sm:$0xf]
      %v414 = vld [vmem:[#allocation9 + $0xc] sm:$0xf]
      %v415 = vld [vmem:[#allocation9 + $0x10] sm:$0xf]
      %v416 = vld [vmem:[#allocation9 + $0x14] sm:$0xf]
      %v417 = vld [vmem:[#allocation9 + $0x18] sm:$0xf]
      %v418 = vld [vmem:[#allocation9 + $0x1c] sm:$0xf]
      %v419 = vld [vmem:[#allocation9 + $0x20] sm:$0xf]
      %v420 = vld [vmem:[#allocation9 + $0x24] sm:$0xf]
      %v421 = vld [vmem:[#allocation9 + $0x28] sm:$0xf]
      %v422 = vld [vmem:[#allocation9 + $0x2c] sm:$0xf]
      %v423 = vld [vmem:[#allocation9 + $0x30] sm:$0xf]
      %v424 = vld [vmem:[#allocation9 + $0x34] sm:$0xf]
      %v425 = vld [vmem:[#allocation9 + $0x38] sm:$0xf]
      %v426 = vld [vmem:[#allocation9 + $0x3c] sm:$0xf]
      %v427 = vld [vmem:[%s8] sm:$0x1]
      %v429 = vlaneseq
      %v430 = vshrl.u32 %v429, 7
      %v431 = vsub.s32 0, %v430
      %v432 = vrot.slane %v427, %v431
      %v450 = vunpack.c.l.b16 %v411
      %v451 = vunpack.c.l.b16 %v412
      %v452 = vunpack.c.l.b16 %v413
      %v453 = vunpack.c.l.b16 %v414
      %v454 = vunpack.c.l.b16 %v415
      %v455 = vunpack.c.l.b16 %v416
      %v456 = vunpack.c.l.b16 %v417
      %v457 = vunpack.c.l.b16 %v418
      %v458 = vunpack.c.l.b16 %v419
      %v459 = vunpack.c.l.b16 %v420
      %v460 = vunpack.c.l.b16 %v421
      %v461 = vunpack.c.l.b16 %v422
      %v462 = vunpack.c.l.b16 %v423
      %v463 = vunpack.c.l.b16 %v424
      %v464 = vunpack.c.l.b16 %v425
      %v465 = vunpack.c.l.b16 %v426
      %v466 = vpack.c.b16 %v451, %v450
      %v467 = vpack.c.b16 %v453, %v452
      %v468 = vpack.c.b16 %v455, %v454
      %v469 = vpack.c.b16 %v457, %v456
      %v470 = vpack.c.b16 %v459, %v458
      %v471 = vpack.c.b16 %v461, %v460
      %v472 = vpack.c.b16 %v463, %v462
      %v473 = vpack.c.b16 %v465, %v464
      %482 = vmatprep.subr.bf16.mxu0 0
      %483 = vmatpush1.bf16.msra.mxu0 %v466
      %484 = vmatprep.subr.bf16.mxu0 0
      %485 = vmatpush1.bf16.msra.mxu0 %v467
      %486 = vmatprep.subr.bf16.mxu0 0
      %487 = vmatpush1.bf16.msra.mxu0 %v468
      %488 = vmatprep.subr.bf16.mxu0 0
      %489 = vmatpush1.bf16.msra.mxu0 %v469
      %490 = vmatprep.subr.bf16.mxu0 0
      %491 = vmatpush1.bf16.msra.mxu0 %v470
      %492 = vmatprep.subr.bf16.mxu0 0
      %493 = vmatpush1.bf16.msra.mxu0 %v471
      %494 = vmatprep.subr.bf16.mxu0 0
      %495 = vmatpush1.bf16.msra.mxu0 %v472
      %496 = vmatprep.subr.bf16.mxu0 0
      %497 = vmatpush1.bf16.msra.mxu0 %v473
      %498 = vmatprep.subr.bf16.mxu0 0
      %499 = vmatpush1.bf16.msra.mxu0 0
      %500 = vmatprep.subr.bf16.mxu0 0
      %501 = vmatpush1.bf16.msra.mxu0 0
      %502 = vmatprep.subr.bf16.mxu0 0
      %503 = vmatpush1.bf16.msra.mxu0 0
      %504 = vmatprep.subr.bf16.mxu0 0
      %505 = vmatpush1.bf16.msra.mxu0 0
      %506 = vmatprep.subr.bf16.mxu0 0
      %507 = vmatpush1.bf16.msra.mxu0 0
      %508 = vmatprep.subr.bf16.mxu0 0
      %509 = vmatpush1.bf16.msra.mxu0 0
      %510 = vmatprep.subr.bf16.mxu0 0
      %511 = vmatpush1.bf16.msra.mxu0 0
      %512 = vmatprep.subr.bf16.mxu0 0
      %513 = vmatpush1.bf16.msra.mxu0 0
      %514 = vmatprep.mubr.bf16.mxu0 0
      %515 = vmatmul.mubr.bf16.gmra.mrb[0].mxu0 %v410
      %v516 = vpop.f32.mrb[0].mxu0
      %v517 = vadd.f32 %v432, %v516
      %v518 = vpop.f32.mrb[0].mxu0
      %v519 = vpop.f32.mrb[0].mxu0
      %v520 = vadd.f32 %v432, %v519
      %v521 = vpop.f32.mrb[0].mxu0
      %522 = vdwg.mxu0
      %v523 = vmax.f32 %v517, 0.0
      %v524 = vmax.f32 %v520, 0.0
      %v525 = vpack.c.bf16 %v524, %v523
      %v526 = vld [vmem:[#allocation11] sm:$0xf]
      %v527 = vld [vmem:[#allocation11 + $0x4] sm:$0xf]
      %v528 = vld [vmem:[#allocation11 + $0x8] sm:$0xf]
      %v529 = vld [vmem:[#allocation11 + $0xc] sm:$0xf]
      %v530 = vld [vmem:[#allocation11 + $0x10] sm:$0xf]
      %v531 = vld [vmem:[#allocation11 + $0x14] sm:$0xf]
      %v532 = vld [vmem:[#allocation11 + $0x18] sm:$0xf]
      %v533 = vld [vmem:[#allocation11 + $0x1c] sm:$0xf]
      %v534 = vld [vmem:[#allocation11 + $0x20] sm:$0xf]
      %v535 = vld [vmem:[#allocation11 + $0x24] sm:$0xf]
      %v536 = vld [vmem:[#allocation11 + $0x28] sm:$0xf]
      %v537 = vld [vmem:[#allocation11 + $0x2c] sm:$0xf]
      %v538 = vld [vmem:[#allocation11 + $0x30] sm:$0xf]
      %v539 = vld [vmem:[#allocation11 + $0x34] sm:$0xf]
      %v540 = vld [vmem:[#allocation11 + $0x38] sm:$0xf]
      %v541 = vld [vmem:[#allocation11 + $0x3c] sm:$0xf]
      %v542 = vld [vmem:[%s10] sm:$0x1]
      %v544 = vlaneseq
      %v545 = vshrl.u32 %v544, 7
      %v546 = vsub.s32 0, %v545
      %v547 = vrot.slane %v542, %v546
      %v565 = vunpack.c.l.b16 %v526
      %v566 = vunpack.c.l.b16 %v527
      %v567 = vunpack.c.l.b16 %v528
      %v568 = vunpack.c.l.b16 %v529
      %v569 = vunpack.c.l.b16 %v530
      %v570 = vunpack.c.l.b16 %v531
      %v571 = vunpack.c.l.b16 %v532
      %v572 = vunpack.c.l.b16 %v533
      %v573 = vunpack.c.l.b16 %v534
      %v574 = vunpack.c.l.b16 %v535
      %v575 = vunpack.c.l.b16 %v536
      %v576 = vunpack.c.l.b16 %v537
      %v577 = vunpack.c.l.b16 %v538
      %v578 = vunpack.c.l.b16 %v539
      %v579 = vunpack.c.l.b16 %v540
      %v580 = vunpack.c.l.b16 %v541
      %v581 = vpack.c.b16 %v566, %v565
      %v582 = vpack.c.b16 %v568, %v567
      %v583 = vpack.c.b16 %v570, %v569
      %v584 = vpack.c.b16 %v572, %v571
      %v585 = vpack.c.b16 %v574, %v573
      %v586 = vpack.c.b16 %v576, %v575
      %v587 = vpack.c.b16 %v578, %v577
      %v588 = vpack.c.b16 %v580, %v579
      %597 = vmatprep.subr.bf16.mxu0 0
      %598 = vmatpush1.bf16.msra.mxu0 %v581
      %599 = vmatprep.subr.bf16.mxu0 0
      %600 = vmatpush1.bf16.msra.mxu0 %v582
      %601 = vmatprep.subr.bf16.mxu0 0
      %602 = vmatpush1.bf16.msra.mxu0 %v583
      %603 = vmatprep.subr.bf16.mxu0 0
      %604 = vmatpush1.bf16.msra.mxu0 %v584
      %605 = vmatprep.subr.bf16.mxu0 0
      %606 = vmatpush1.bf16.msra.mxu0 %v585
      %607 = vmatprep.subr.bf16.mxu0 0
      %608 = vmatpush1.bf16.msra.mxu0 %v586
      %609 = vmatprep.subr.bf16.mxu0 0
      %610 = vmatpush1.bf16.msra.mxu0 %v587
      %611 = vmatprep.subr.bf16.mxu0 0
      %612 = vmatpush1.bf16.msra.mxu0 %v588
      %613 = vmatprep.subr.bf16.mxu0 0
      %614 = vmatpush1.bf16.msra.mxu0 0
      %615 = vmatprep.subr.bf16.mxu0 0
      %616 = vmatpush1.bf16.msra.mxu0 0
      %617 = vmatprep.subr.bf16.mxu0 0
      %618 = vmatpush1.bf16.msra.mxu0 0
      %619 = vmatprep.subr.bf16.mxu0 0
      %620 = vmatpush1.bf16.msra.mxu0 0
      %621 = vmatprep.subr.bf16.mxu0 0
      %622 = vmatpush1.bf16.msra.mxu0 0
      %623 = vmatprep.subr.bf16.mxu0 0
      %624 = vmatpush1.bf16.msra.mxu0 0
      %625 = vmatprep.subr.bf16.mxu0 0
      %626 = vmatpush1.bf16.msra.mxu0 0
      %627 = vmatprep.subr.bf16.mxu0 0
      %628 = vmatpush1.bf16.msra.mxu0 0
      %629 = vmatprep.mubr.bf16.mxu0 0
      %630 = vmatmul.mubr.bf16.gmra.mrb[0].mxu0 %v525
      %v631 = vpop.f32.mrb[0].mxu0
      %v632 = vadd.f32 %v547, %v631
      %v633 = vpop.f32.mrb[0].mxu0
      %v634 = vpop.f32.mrb[0].mxu0
      %v635 = vadd.f32 %v547, %v634
      %v636 = vpop.f32.mrb[0].mxu0
      %637 = vdwg.mxu0
      %v638 = vtanh.pop %v632
      %v639 = vtanh.pop %v635
      %640 = vst [vmem:[#allocation12] sm:$0xff] %v638
      %641 = vst [vmem:[#allocation12 + $0x8] sm:$0xff] %v639
    $region73: #{tpu_custom_call.1} parent=1 // pred_fallthru
      _
    // Predicated region
    $region74: #{tpu_custom_call.1} parent=1 // pred_check
      _
    $region75: #{tpu_custom_call.1} parent=1 // pred_check_branch
      %643 = sbr.rel (0) target = $region77
    $region76: #{tpu_custom_call.1} parent=1 // pred_region
      %s645 = ssub.s32 256, 256
      %646 = vsyncadd [#allocation5], %s645
      %s647 = sshll.u32 [#allocation12], 4
      %s648 = int_to_ptr.vmem [resolvable:$true] %s647
      %653 = dma.vmem_to_hbm [thread:$0]  %s648, 256, %s11, [#allocation5], 128, 128, 8
    $region77: #{tpu_custom_call.1} parent=1 // pred_fallthru
      _
    // Predicated region
    $region78: #{tpu_custom_call.1} parent=1 // pred_check
      _
    $region79: #{tpu_custom_call.1} parent=1 // pred_check_branch
      %655 = sbr.rel (0) target = $region81
    $region80: #{tpu_custom_call.1} parent=1 // pred_region
      %656 = dma.done [#allocation5], 256
    $region81: #{tpu_custom_call.1} parent=1 // pred_fallthru
      _
    %657 = vsyncpa [#allocation4], 1
    %658 = vsyncpa [#allocation7], 1
    %659 = vsyncpa [#allocation10], 1
    %660 = vsyncpa [#allocation5], 1

</llo_original>
